<compile_context>
chip_gen: v7x
topology: tpu7x:2x2x1
jax: 0.10.0
libtpu: 0.0.40
codegen_flags: <defaults>
</compile_context>

<pallas_src>
import functools

import jax
import jax.numpy as jnp
from jax import lax
from jax.experimental import pallas as pl
from jax.experimental.pallas import tpu as pltpu


def _mvdnn_fused_kernel(x_ref, w1_ref, w2_ref, wc_ref, bias_ref, out_ref):
    """Fused 3-tower MLP + cosine head.

    x_ref   : [TB, Din]        concat([user_emb | mov_emb | bok_emb])
    w1_ref  : [Din, 3M]        block-diag(Wu1, Wm1, Wb1)
    w2_ref  : [3M, 3M]         block-diag(Wu2, Wm2, Wb2)
    wc_ref  : [3M, 3K]         block-diag(Wcu, Wci, Wci)
    bias_ref: [3, max(3M,3K)]  rows: packed b1 | b2 | bc (zero padded)
    out_ref : [TB, 2]          col 0 = rating_mov, col 1 = rating_bok
    """
    f32 = jnp.float32
    h3 = w1_ref.shape[1]          # 3 * latent_media_dim
    k3 = wc_ref.shape[1]          # 3 * latent_dim
    k = k3 // 3

    x = x_ref[...]

    # Layer 1 (three towers as one block-diagonal matmul), Dropout=identity, Tanh.
    h = jnp.dot(x, w1_ref[...], preferred_element_type=f32) + bias_ref[0:1, :h3]
    h = jnp.tanh(h)

    # Layer 2 (block-diagonal).
    med = jnp.dot(h, w2_ref[...], preferred_element_type=f32) + bias_ref[1:2, :h3]

    # Cosine_Score projections (user->Wcu, mov->Wci, bok->Wci) fused.
    lat = jnp.dot(med, wc_ref[...], preferred_element_type=f32) + bias_ref[2:3, :k3]

    u_lat = lat[:, 0:k]
    m_lat = lat[:, k:2 * k]
    b_lat = lat[:, 2 * k:3 * k]

    # torch.cosine_similarity(dim=1, eps=1e-8) == num * rsqrt(max(|a|^2|b|^2, eps^2))
    nu2 = jnp.sum(u_lat * u_lat, axis=-1, keepdims=True)

    def cos_with(v):
        num = jnp.sum(u_lat * v, axis=-1, keepdims=True)
        nv2 = jnp.sum(v * v, axis=-1, keepdims=True)
        return num * lax.rsqrt(jnp.maximum(nu2 * nv2, 1e-16))

    out_ref[...] = jnp.concatenate([cos_with(m_lat), cos_with(b_lat)], axis=-1)


@functools.partial(jax.jit, static_argnames=("batch_size",))
def mvdnn_forward(packed, batch_size, u, i_mov, i_bok):
    """Embedding gathers in plain JAX glue + one fused Pallas kernel."""
    B = batch_size

    # Embedding lookups (gathers) and a single lane-dense concat.
    # TODO(synk): the gathers could be moved in-kernel via PrefetchScalarGridSpec
    # to avoid the extra HBM round-trip; left in JAX glue for simplicity.
    ue = packed["E_user"][u]                           # [B, (mc+bc)*L]
    me = packed["E_mov"][i_mov].reshape(B, -1)         # [B, mc*L]
    be = packed["E_bok"][i_bok].reshape(B, -1)         # [B, bc*L]
    x = jnp.concatenate([ue, me, be], axis=-1)         # [B, Din]  (128 lanes here)

    w1, w2, wc, bias = packed["W1"], packed["W2"], packed["Wc"], packed["bias"]
    din, h3 = w1.shape
    k3 = wc.shape[1]
    bw = bias.shape[1]

    # Batch tiling (grid of 1 at small batch; scales / shards across TCs at large B).
    tile_b = batch_size if batch_size <= 128 else 128
    if batch_size % tile_b != 0:
        tile_b = batch_size
    grid = (batch_size // tile_b,)

    cost = pl.CostEstimate(
        flops=2 * B * (din * h3 + h3 * h3 + h3 * k3),
        transcendentals=B * h3 + 2 * B,
        bytes_accessed=4 * (B * din + din * h3 + h3 * h3 + h3 * k3 + 3 * bw + 2 * B),
    )

    out = pl.pallas_call(
        _mvdnn_fused_kernel,
        out_shape=jax.ShapeDtypeStruct((B, 2), jnp.float32),
        grid=grid,
        in_specs=[
            pl.BlockSpec((tile_b, din), lambda i: (i, 0)),   # activations: batch-tiled
            pl.BlockSpec((din, h3), lambda i: (0, 0)),       # weights: VMEM-resident
            pl.BlockSpec((h3, h3), lambda i: (0, 0)),
            pl.BlockSpec((h3, k3), lambda i: (0, 0)),
            pl.BlockSpec((3, bw), lambda i: (0, 0)),
        ],
        out_specs=pl.BlockSpec((tile_b, 2), lambda i: (i, 0)),
        compiler_params=pltpu.CompilerParams(dimension_semantics=("parallel",)),
        cost_estimate=cost,
    )(x, w1, w2, wc, bias)

    return out[:, 0], out[:, 1]


def init_params(key, input_dim_user, input_mov_item, input_bok_item,
                input_mov_col, input_bok_col, latent_item_dim,
                latent_media_dim, latent_dim):
    """Deterministic synthetic parameter init (shapes follow the torch module)."""
    keys = jax.random.split(key, 20)
    L = latent_item_dim
    Du = (input_mov_col + input_bok_col) * L
    Dm = input_mov_col * L
    Db = input_bok_col * L
    M = latent_media_dim
    K = latent_dim

    def lin(k, fan_in, fan_out):
        bound = 1.0 / jnp.sqrt(fan_in)
        kw, kb = jax.random.split(k)
        w = jax.random.uniform(kw, (fan_in, fan_out), jnp.float32, -bound, bound)
        b = jax.random.uniform(kb, (1, fan_out), jnp.float32, -bound, bound)
        return w, b

    p = {}
    p["E_user"] = jax.random.normal(keys[0], (input_dim_user, Du), jnp.float32)
    p["E_mov"] = jax.random.normal(keys[1], (input_mov_item, L), jnp.float32)
    p["E_bok"] = jax.random.normal(keys[2], (input_bok_item, L), jnp.float32)

    p["Wu1"], p["bu1"] = lin(keys[3], Du, M)
    p["Wu2"], p["bu2"] = lin(keys[4], M, M)
    p["Wm1"], p["bm1"] = lin(keys[5], Dm, M)
    p["Wm2"], p["bm2"] = lin(keys[6], M, M)
    p["Wb1"], p["bb1"] = lin(keys[7], Db, M)
    p["Wb2"], p["bb2"] = lin(keys[8], M, M)

    # Cosine_Score: user-side and item-side projections media -> latent_dim
    p["Wcu"], p["bcu"] = lin(keys[9], M, K)
    p["Wci"], p["bci"] = lin(keys[10], M, K)
    return p


def pack_params(p):
    """Pack per-tower weights/biases into block-diagonal / stacked arrays (host-side, once)."""
    Du, M = p["Wu1"].shape
    Dm = p["Wm1"].shape[0]
    Db = p["Wb1"].shape[0]
    K = p["Wcu"].shape[1]
    H3, K3 = 3 * M, 3 * K
    Din = Du + Dm + Db

    W1 = jnp.zeros((Din, H3), jnp.float32)
    W1 = (W1.at[:Du, :M].set(p["Wu1"])
            .at[Du:Du + Dm, M:2 * M].set(p["Wm1"])
            .at[Du + Dm:, 2 * M:].set(p["Wb1"]))

    W2 = jnp.zeros((H3, H3), jnp.float32)
    W2 = (W2.at[:M, :M].set(p["Wu2"])
            .at[M:2 * M, M:2 * M].set(p["Wm2"])
            .at[2 * M:, 2 * M:].set(p["Wb2"]))

    Wc = jnp.zeros((H3, K3), jnp.float32)
    Wc = (Wc.at[:M, :K].set(p["Wcu"])
            .at[M:2 * M, K:2 * K].set(p["Wci"])
            .at[2 * M:, 2 * K:].set(p["Wci"]))

    BW = max(H3, K3)
    b1 = jnp.concatenate([p["bu1"], p["bm1"], p["bb1"]], axis=-1)[0]
    b2 = jnp.concatenate([p["bu2"], p["bm2"], p["bb2"]], axis=-1)[0]
    bc = jnp.concatenate([p["bcu"], p["bci"], p["bci"]], axis=-1)[0]
    bias = jnp.zeros((3, BW), jnp.float32)
    bias = bias.at[0, :H3].set(b1).at[1, :H3].set(b2).at[2, :K3].set(bc)

    return {
        "E_user": p["E_user"], "E_mov": p["E_mov"], "E_bok": p["E_bok"],
        "W1": W1, "W2": W2, "Wc": Wc, "bias": bias,
    }


def _reference_forward(params, batch_size, u, i_mov, i_bok):
    """Pure jnp reference (unfused, follows the torch module) for correctness checking."""
    def mlp(x, w1, b1, w2, b2):
        return jnp.tanh(x @ w1 + b1) @ w2 + b2

    ue = params["E_user"][u]
    me = params["E_mov"][i_mov].reshape(batch_size, -1)
    be = params["E_bok"][i_bok].reshape(batch_size, -1)

    u_med = mlp(ue, params["Wu1"], params["bu1"], params["Wu2"], params["bu2"])
    m_med = mlp(me, params["Wm1"], params["bm1"], params["Wm2"], params["bm2"])
    b_med = mlp(be, params["Wb1"], params["bb1"], params["Wb2"], params["bb2"])

    u_lat = u_med @ params["Wcu"] + params["bcu"]
    m_lat = m_med @ params["Wci"] + params["bci"]
    b_lat = b_med @ params["Wci"] + params["bci"]

    def cos(a, b):
        num = jnp.sum(a * b, -1)
        den = jnp.maximum(jnp.linalg.norm(a, axis=-1) * jnp.linalg.norm(b, axis=-1), 1e-8)
        return num / den

    return cos(u_lat, m_lat), cos(u_lat, b_lat)


if __name__ == "__main__":
    # Small shapes consistent with the module's forward.
    batch_size = 8
    input_mov_col = 4
    input_bok_col = 4
    latent_item_dim = 8
    latent_media_dim = 32
    latent_dim = 16
    input_dim_user = 20
    input_mov_item = 30
    input_bok_item = 30
    attn_dropout = 0.1  # identity at inference

    key = jax.random.PRNGKey(0)
    kp, ku, km, kb = jax.random.split(key, 4)

    params = init_params(
        kp, input_dim_user, input_mov_item, input_bok_item,
        input_mov_col, input_bok_col, latent_item_dim,
        latent_media_dim, latent_dim,
    )
    packed = pack_params(params)

    u = jax.random.randint(ku, (batch_size,), 0, input_dim_user, jnp.int32)
    i_mov = jax.random.randint(km, (batch_size, input_mov_col), 0, input_mov_item, jnp.int32)
    i_bok = jax.random.randint(kb, (batch_size, input_bok_col), 0, input_bok_item, jnp.int32)

    rating_mov, rating_bok = mvdnn_forward(packed, batch_size, u, i_mov, i_bok)
    jax.block_until_ready((rating_mov, rating_bok))

    ref_mov, ref_bok = _reference_forward(params, batch_size, u, i_mov, i_bok)
    assert jnp.allclose(rating_mov, ref_mov, atol=1e-5), "movie ratings mismatch"
    assert jnp.allclose(rating_bok, ref_bok, atol=1e-5), "book ratings mismatch"
    assert rating_mov.shape == (batch_size,) and rating_bok.shape == (batch_size,)

    print("KERNEL_OK")
</pallas_src>

<mosaic_0001>
module attributes {stable_mosaic.version = 11 : i64} {
  func.func @_mvdnn_fused_kernel(%arg0: i32, %arg1: memref<8x128xf32, #tpu.memory_space<vmem>>, %arg2: memref<128x96xf32, #tpu.memory_space<vmem>>, %arg3: memref<96x96xf32, #tpu.memory_space<vmem>>, %arg4: memref<96x48xf32, #tpu.memory_space<vmem>>, %arg5: memref<3x96xf32, #tpu.memory_space<vmem>>, %arg6: memref<8x2xf32, #tpu.memory_space<vmem>>) attributes {dimension_semantics = [#tpu.dimension_semantics<parallel>], iteration_bounds = array<i64: 1>, scalar_prefetch = 0 : i64, scratch_operands = 0 : i64, tpu.core_type = #tpu.core_type<tc>, window_params = [{transform_indices = @transform_0, window_bounds = array<i64: 8, 128>}, {pipeline_mode = #tpu.pipeline_mode<synchronous>, transform_indices = @transform_1, window_bounds = array<i64: 128, 96>}, {pipeline_mode = #tpu.pipeline_mode<synchronous>, transform_indices = @transform_2, window_bounds = array<i64: 96, 96>}, {pipeline_mode = #tpu.pipeline_mode<synchronous>, transform_indices = @transform_3, window_bounds = array<i64: 96, 48>}, {pipeline_mode = #tpu.pipeline_mode<synchronous>, transform_indices = @transform_4, window_bounds = array<i64: 3, 96>}, {transform_indices = @transform_5, window_bounds = array<i64: 8, 2>}]} {
    %c0 = arith.constant 0 : index
    %c0_0 = arith.constant 0 : index
    %0 = vector.load %arg1[%c0, %c0_0] : memref<8x128xf32, #tpu.memory_space<vmem>>, vector<8x128xf32>
    %c0_1 = arith.constant 0 : index
    %c0_2 = arith.constant 0 : index
    %1 = vector.load %arg2[%c0_1, %c0_2] : memref<128x96xf32, #tpu.memory_space<vmem>>, vector<128x96xf32>
    %cst = arith.constant dense<0.000000e+00> : vector<8x96xf32>
    %2 = tpu.matmul %0, %1, %cst {dimension_numbers = #tpu.dot_dimension_numbers<[1], [0], [0], [1], [0, 0, 1, 1], [], []>} : vector<8x128xf32>, vector<128x96xf32>, vector<8x96xf32> -> vector<8x96xf32>
    %c0_3 = arith.constant 0 : index
    %c0_4 = arith.constant 0 : index
    %3 = vector.load %arg5[%c0_3, %c0_4] : memref<3x96xf32, #tpu.memory_space<vmem>>, vector<1x96xf32>
    %4 = vector.broadcast %3 : vector<1x96xf32> to vector<8x96xf32>
    %5 = arith.addf %2, %4 : vector<8x96xf32>
    %6 = math.tanh %5 : vector<8x96xf32>
    %c0_5 = arith.constant 0 : index
    %c0_6 = arith.constant 0 : index
    %7 = vector.load %arg3[%c0_5, %c0_6] : memref<96x96xf32, #tpu.memory_space<vmem>>, vector<96x96xf32>
    %cst_7 = arith.constant dense<0.000000e+00> : vector<8x96xf32>
    %8 = tpu.matmul %6, %7, %cst_7 {dimension_numbers = #tpu.dot_dimension_numbers<[1], [0], [0], [1], [0, 0, 1, 1], [], []>} : vector<8x96xf32>, vector<96x96xf32>, vector<8x96xf32> -> vector<8x96xf32>
    %c1 = arith.constant 1 : index
    %c0_8 = arith.constant 0 : index
    %9 = vector.load %arg5[%c1, %c0_8] : memref<3x96xf32, #tpu.memory_space<vmem>>, vector<1x96xf32>
    %10 = vector.broadcast %9 : vector<1x96xf32> to vector<8x96xf32>
    %11 = arith.addf %8, %10 : vector<8x96xf32>
    %c0_9 = arith.constant 0 : index
    %c0_10 = arith.constant 0 : index
    %12 = vector.load %arg4[%c0_9, %c0_10] : memref<96x48xf32, #tpu.memory_space<vmem>>, vector<96x48xf32>
    %cst_11 = arith.constant dense<0.000000e+00> : vector<8x48xf32>
    %13 = tpu.matmul %11, %12, %cst_11 {dimension_numbers = #tpu.dot_dimension_numbers<[1], [0], [0], [1], [0, 0, 1, 1], [], []>} : vector<8x96xf32>, vector<96x48xf32>, vector<8x48xf32> -> vector<8x48xf32>
    %c2 = arith.constant 2 : index
    %c0_12 = arith.constant 0 : index
    %14 = vector.load %arg5[%c2, %c0_12] : memref<3x96xf32, #tpu.memory_space<vmem>>, vector<1x48xf32>
    %15 = vector.broadcast %14 : vector<1x48xf32> to vector<8x48xf32>
    %16 = arith.addf %13, %15 : vector<8x48xf32>
    %17 = vector.extract_strided_slice %16 {offsets = [0, 0], sizes = [8, 16], strides = [1, 1]} : vector<8x48xf32> to vector<8x16xf32>
    %18 = vector.extract_strided_slice %16 {offsets = [0, 16], sizes = [8, 16], strides = [1, 1]} : vector<8x48xf32> to vector<8x16xf32>
    %19 = vector.extract_strided_slice %16 {offsets = [0, 32], sizes = [8, 16], strides = [1, 1]} : vector<8x48xf32> to vector<8x16xf32>
    %20 = arith.mulf %17, %17 : vector<8x16xf32>
    %cst_13 = arith.constant dense<0.000000e+00> : vector<8xf32>
    %21 = vector.multi_reduction <add>, %20, %cst_13 [1] : vector<8x16xf32> to vector<8xf32>
    %22 = vector.shape_cast %21 : vector<8xf32> to vector<8x1xf32>
    %23 = arith.mulf %17, %18 : vector<8x16xf32>
    %cst_14 = arith.constant dense<0.000000e+00> : vector<8xf32>
    %24 = vector.multi_reduction <add>, %23, %cst_14 [1] : vector<8x16xf32> to vector<8xf32>
    %25 = vector.shape_cast %24 : vector<8xf32> to vector<8x1xf32>
    %26 = arith.mulf %18, %18 : vector<8x16xf32>
    %cst_15 = arith.constant dense<0.000000e+00> : vector<8xf32>
    %27 = vector.multi_reduction <add>, %26, %cst_15 [1] : vector<8x16xf32> to vector<8xf32>
    %28 = vector.shape_cast %27 : vector<8xf32> to vector<8x1xf32>
    %29 = arith.mulf %22, %28 : vector<8x1xf32>
    %cst_16 = arith.constant 1.000000e-16 : f32
    %30 = vector.broadcast %cst_16 : f32 to vector<8x1xf32>
    %31 = arith.maximumf %29, %30 : vector<8x1xf32>
    %32 = math.rsqrt %31 : vector<8x1xf32>
    %33 = arith.mulf %25, %32 : vector<8x1xf32>
    %34 = arith.mulf %17, %19 : vector<8x16xf32>
    %cst_17 = arith.constant dense<0.000000e+00> : vector<8xf32>
    %35 = vector.multi_reduction <add>, %34, %cst_17 [1] : vector<8x16xf32> to vector<8xf32>
    %36 = vector.shape_cast %35 : vector<8xf32> to vector<8x1xf32>
    %37 = arith.mulf %19, %19 : vector<8x16xf32>
    %cst_18 = arith.constant dense<0.000000e+00> : vector<8xf32>
    %38 = vector.multi_reduction <add>, %37, %cst_18 [1] : vector<8x16xf32> to vector<8xf32>
    %39 = vector.shape_cast %38 : vector<8xf32> to vector<8x1xf32>
    %40 = arith.mulf %22, %39 : vector<8x1xf32>
    %cst_19 = arith.constant 1.000000e-16 : f32
    %41 = vector.broadcast %cst_19 : f32 to vector<8x1xf32>
    %42 = arith.maximumf %40, %41 : vector<8x1xf32>
    %43 = math.rsqrt %42 : vector<8x1xf32>
    %44 = arith.mulf %36, %43 : vector<8x1xf32>
    %45 = tpu.concatenate %33, %44 in 1 : vector<8x1xf32>, vector<8x1xf32> -> vector<8x2xf32>
    %c0_20 = arith.constant 0 : index
    %c0_21 = arith.constant 0 : index
    %46 = vector.load %arg6[%c0_20, %c0_21] : memref<8x2xf32, #tpu.memory_space<vmem>>, vector<8x2xf32>
    tpu.vector_store %arg6[%c0_20, %c0_21], %45 {strides = array<i32>} : memref<8x2xf32, #tpu.memory_space<vmem>>, vector<8x2xf32>,
    return
  }
  func.func @transform_0(%arg0: i32) -> (i32, i32) {
    %c0_i32 = arith.constant 0 : i32
    %c0_i32_0 = arith.constant 0 : i32
    return %arg0, %c0_i32 : i32, i32
  }
  func.func @transform_1(%arg0: i32) -> (i32, i32) {
    %c0_i32 = arith.constant 0 : i32
    %c0_i32_0 = arith.constant 0 : i32
    %c0_i32_1 = arith.constant 0 : i32
    return %c0_i32, %c0_i32_0 : i32, i32
  }
  func.func @transform_2(%arg0: i32) -> (i32, i32) {
    %c0_i32 = arith.constant 0 : i32
    %c0_i32_0 = arith.constant 0 : i32
    %c0_i32_1 = arith.constant 0 : i32
    return %c0_i32, %c0_i32_0 : i32, i32
  }
  func.func @transform_3(%arg0: i32) -> (i32, i32) {
    %c0_i32 = arith.constant 0 : i32
    %c0_i32_0 = arith.constant 0 : i32
    %c0_i32_1 = arith.constant 0 : i32
    return %c0_i32, %c0_i32_0 : i32, i32
  }
  func.func @transform_4(%arg0: i32) -> (i32, i32) {
    %c0_i32 = arith.constant 0 : i32
    %c0_i32_0 = arith.constant 0 : i32
    %c0_i32_1 = arith.constant 0 : i32
    return %c0_i32, %c0_i32_0 : i32, i32
  }
  func.func @transform_5(%arg0: i32) -> (i32, i32) {
    %c0_i32 = arith.constant 0 : i32
    %c0_i32_0 = arith.constant 0 : i32
    return %arg0, %c0_i32 : i32, i32
  }
}

</mosaic_0001>

<llo_original>
// kernel: mvdnn_forward.1
$region0: #{mvdnn_forward.1}
  #allocation0 [shape = 'u32[]', space=smem, size = 0x4, offset = 0x4, fixed_abs, tag = 'smem constant byte address 0x4 - core index']
  #allocation1 [shape = 'u32[144,128]{1,0:T(1,128)}', space=vmem, size = 0x12000, scoped, tag = 'internal scratch']
  %s0 = inlined_call_operand.vmem [shape: f32[8,128], index: 0, kind: input, shape index: {}]
  %s1 = inlined_call_operand.vmem [shape: f32[128,96], index: 1, kind: input, shape index: {}]
  %s2 = inlined_call_operand.vmem [shape: f32[96,96], index: 2, kind: input, shape index: {}]
  %s3 = inlined_call_operand.vmem [shape: f32[96,48], index: 3, kind: input, shape index: {}]
  %s4 = inlined_call_operand.vmem [shape: f32[3,96], index: 4, kind: input, shape index: {}]
  %s5 = inlined_call_operand.vmem [shape: f32[8,2], index: 5, kind: output, shape index: {}]
  %s6 = sld [smem:[#allocation0]]
  $region30: #{mvdnn_forward.1} parent=0
    _
  %s8 = ssub.s32 1, %s6
  %s9 = scalar_select 0, %s8, %s6
  // Predicated region
  $region2: #{mvdnn_forward.1} parent=0 // pred_check
    _
  $region3: #{mvdnn_forward.1} parent=0 // pred_check_branch
    %11 = sbr.rel (0) target = $region5
  $region4: #{mvdnn_forward.1} parent=0 // pred_region
    _
  $region5: #{mvdnn_forward.1} parent=0 // pred_fallthru
    _
  // Predicated region
  $region6: #{mvdnn_forward.1} parent=0 // pred_check
    _
  $region7: #{mvdnn_forward.1} parent=0 // pred_check_branch
    %13 = sbr.rel (0) target = $region9
  $region8: #{mvdnn_forward.1} parent=0 // pred_region
    _
  $region9: #{mvdnn_forward.1} parent=0 // pred_fallthru
    _
  // Predicated region
  $region10: #{mvdnn_forward.1} parent=0 // pred_check
    _
  $region11: #{mvdnn_forward.1} parent=0 // pred_check_branch
    %15 = sbr.rel (0) target = $region13
  $region12: #{mvdnn_forward.1} parent=0 // pred_region
    _
  $region13: #{mvdnn_forward.1} parent=0 // pred_fallthru
    _
  // Predicated region
  $region14: #{mvdnn_forward.1} parent=0 // pred_check
    _
  $region15: #{mvdnn_forward.1} parent=0 // pred_check_branch
    %17 = sbr.rel (0) target = $region17
  $region16: #{mvdnn_forward.1} parent=0 // pred_region
    _
  $region17: #{mvdnn_forward.1} parent=0 // pred_fallthru
    _
  // Predicated region
  $region18: #{mvdnn_forward.1} parent=0 // pred_check
    _
  $region19: #{mvdnn_forward.1} parent=0 // pred_check_branch
    %19 = sbr.rel (0) target = $region21
  $region20: #{mvdnn_forward.1} parent=0 // pred_region
    _
  $region21: #{mvdnn_forward.1} parent=0 // pred_fallthru
    _
  %v20 = vld [vmem:[%s0] sm:$0xff]
  %v21 = vld [vmem:[%s1] sm:$0xff]
  %v22 = vld [vmem:[%s1 + $0x8] sm:$0xff]
  %v23 = vld [vmem:[%s1 + $0x10] sm:$0xff]
  %v24 = vld [vmem:[%s1 + $0x18] sm:$0xff]
  %v25 = vld [vmem:[%s1 + $0x20] sm:$0xff]
  %v26 = vld [vmem:[%s1 + $0x28] sm:$0xff]
  %v27 = vld [vmem:[%s1 + $0x30] sm:$0xff]
  %v28 = vld [vmem:[%s1 + $0x38] sm:$0xff]
  %v29 = vld [vmem:[%s1 + $0x40] sm:$0xff]
  %v30 = vld [vmem:[%s1 + $0x48] sm:$0xff]
  %v31 = vld [vmem:[%s1 + $0x50] sm:$0xff]
  %v32 = vld [vmem:[%s1 + $0x58] sm:$0xff]
  %v33 = vld [vmem:[%s1 + $0x60] sm:$0xff]
  %v34 = vld [vmem:[%s1 + $0x68] sm:$0xff]
  %v35 = vld [vmem:[%s1 + $0x70] sm:$0xff]
  %v36 = vld [vmem:[%s1 + $0x78] sm:$0xff]
  %v37 = vld [vmem:[%s4] sm:$0x1]
  %v38 = vlaneseq
  %v39 = vshrl.u32 %v38, 7
  %v40 = vsub.s32 0, %v39
  %v41 = vrot.slane %v37, %v40
  %42 = vmatprep.subr.mxu0 0.0
  %43 = vmatpush1.msra.mxu0 %v21
  %44 = vmatprep.subr.mxu0 0.0
  %45 = vmatpush1.msra.mxu0 %v22
  %46 = vmatprep.subr.mxu0 0.0
  %47 = vmatpush1.msra.mxu0 %v23
  %48 = vmatprep.subr.mxu0 0.0
  %49 = vmatpush1.msra.mxu0 %v24
  %50 = vmatprep.subr.mxu0 0.0
  %51 = vmatpush1.msra.mxu0 %v25
  %52 = vmatprep.subr.mxu0 0.0
  %53 = vmatpush1.msra.mxu0 %v26
  %54 = vmatprep.subr.mxu0 0.0
  %55 = vmatpush1.msra.mxu0 %v27
  %56 = vmatprep.subr.mxu0 0.0
  %57 = vmatpush1.msra.mxu0 %v28
  %58 = vmatprep.subr.mxu0 0.0
  %59 = vmatpush1.msra.mxu0 %v29
  %60 = vmatprep.subr.mxu0 0.0
  %61 = vmatpush1.msra.mxu0 %v30
  %62 = vmatprep.subr.mxu0 0.0
  %63 = vmatpush1.msra.mxu0 %v31
  %64 = vmatprep.subr.mxu0 0.0
  %65 = vmatpush1.msra.mxu0 %v32
  %66 = vmatprep.subr.mxu0 0.0
  %67 = vmatpush1.msra.mxu0 %v33
  %68 = vmatprep.subr.mxu0 0.0
  %69 = vmatpush1.msra.mxu0 %v34
  %70 = vmatprep.subr.mxu0 0.0
  %71 = vmatpush1.msra.mxu0 %v35
  %72 = vmatprep.subr.mxu0 0.0
  %73 = vmatpush1.msra.mxu0 %v36
  %74 = vmatprep.subr.mxu0 0.0
  %75 = vmatpush1.msra.mxu0 0.0
  %76 = vmatprep.subr.mxu0 0.0
  %77 = vmatpush1.msra.mxu0 0.0
  %78 = vmatprep.subr.mxu0 0.0
  %79 = vmatpush1.msra.mxu0 0.0
  %80 = vmatprep.subr.mxu0 0.0
  %81 = vmatpush1.msra.mxu0 0.0
  %82 = vmatprep.subr.mxu0 0.0
  %83 = vmatpush1.msra.mxu0 0.0
  %84 = vmatprep.subr.mxu0 0.0
  %85 = vmatpush1.msra.mxu0 0.0
  %86 = vmatprep.subr.mxu0 0.0
  %87 = vmatpush1.msra.mxu0 0.0
  %88 = vmatprep.subr.mxu0 0.0
  %89 = vmatpush1.msra.mxu0 0.0
  %90 = vmatprep.subr.mxu0 0.0
  %91 = vmatpush1.msra.mxu0 0.0
  %92 = vmatprep.subr.mxu0 0.0
  %93 = vmatpush1.msra.mxu0 0.0
  %94 = vmatprep.subr.mxu0 0.0
  %95 = vmatpush1.msra.mxu0 0.0
  %96 = vmatprep.subr.mxu0 0.0
  %97 = vmatpush1.msra.mxu0 0.0
  %98 = vmatprep.subr.mxu0 0.0
  %99 = vmatpush1.msra.mxu0 0.0
  %100 = vmatprep.subr.mxu0 0.0
  %101 = vmatpush1.msra.mxu0 0.0
  %102 = vmatprep.subr.mxu0 0.0
  %103 = vmatpush1.msra.mxu0 0.0
  %104 = vmatprep.subr.mxu0 0.0
  %105 = vmatpush1.msra.mxu0 0.0
  %106 = vmatprep.mubr.f32.mxu0 0.0
  %107 = vmatmul.mubr.f32.gmra.mrb[0].mxu0 %v20
  %v108 = vpop.f32.mrb[0].mxu0
  %v109 = vadd.f32 %v41, %v108
  %v110 = vpop.f32.mrb[0].mxu0
  %111 = vdwg.mxu0
  %v112 = vtanh.pop %v109
  %v113 = vld [vmem:[%s2] sm:$0xff]
  %v114 = vld [vmem:[%s2 + $0x8] sm:$0xff]
  %v115 = vld [vmem:[%s2 + $0x10] sm:$0xff]
  %v116 = vld [vmem:[%s2 + $0x18] sm:$0xff]
  %v117 = vld [vmem:[%s2 + $0x20] sm:$0xff]
  %v118 = vld [vmem:[%s2 + $0x28] sm:$0xff]
  %v119 = vld [vmem:[%s2 + $0x30] sm:$0xff]
  %v120 = vld [vmem:[%s2 + $0x38] sm:$0xff]
  %v121 = vld [vmem:[%s2 + $0x40] sm:$0xff]
  %v122 = vld [vmem:[%s2 + $0x48] sm:$0xff]
  %v123 = vld [vmem:[%s2 + $0x50] sm:$0xff]
  %v124 = vld [vmem:[%s2 + $0x58] sm:$0xff]
  %v125 = vld [vmem:[%s4 + $0x1] sm:$0x1]
  %v126 = vlaneseq
  %v127 = vshrl.u32 %v126, 7
  %v128 = vsub.s32 0, %v127
  %v129 = vrot.slane %v125, %v128
  %vm130 = vcmask 785408
  %v132 = vsel %vm130, %v112, 0
  %134 = vmatprep.subr.mxu0 0.0
  %135 = vmatpush1.msra.mxu0 %v113
  %136 = vmatprep.subr.mxu0 0.0
  %137 = vmatpush1.msra.mxu0 %v114
  %138 = vmatprep.subr.mxu0 0.0
  %139 = vmatpush1.msra.mxu0 %v115
  %140 = vmatprep.subr.mxu0 0.0
  %141 = vmatpush1.msra.mxu0 %v116
  %142 = vmatprep.subr.mxu0 0.0
  %143 = vmatpush1.msra.mxu0 %v117
  %144 = vmatprep.subr.mxu0 0.0
  %145 = vmatpush1.msra.mxu0 %v118
  %146 = vmatprep.subr.mxu0 0.0
  %147 = vmatpush1.msra.mxu0 %v119
  %148 = vmatprep.subr.mxu0 0.0
  %149 = vmatpush1.msra.mxu0 %v120
  %150 = vmatprep.subr.mxu0 0.0
  %151 = vmatpush1.msra.mxu0 %v121
  %152 = vmatprep.subr.mxu0 0.0
  %153 = vmatpush1.msra.mxu0 %v122
  %154 = vmatprep.subr.mxu0 0.0
  %155 = vmatpush1.msra.mxu0 %v123
  %156 = vmatprep.subr.mxu0 0.0
  %157 = vmatpush1.msra.mxu0 %v124
  %158 = vmatprep.subr.mxu0 0.0
  %159 = vmatpush1.msra.mxu0 0.0
  %160 = vmatprep.subr.mxu0 0.0
  %161 = vmatpush1.msra.mxu0 0.0
  %162 = vmatprep.subr.mxu0 0.0
  %163 = vmatpush1.msra.mxu0 0.0
  %164 = vmatprep.subr.mxu0 0.0
  %165 = vmatpush1.msra.mxu0 0.0
  %166 = vmatprep.subr.mxu0 0.0
  %167 = vmatpush1.msra.mxu0 0.0
  %168 = vmatprep.subr.mxu0 0.0
  %169 = vmatpush1.msra.mxu0 0.0
  %170 = vmatprep.subr.mxu0 0.0
  %171 = vmatpush1.msra.mxu0 0.0
  %172 = vmatprep.subr.mxu0 0.0
  %173 = vmatpush1.msra.mxu0 0.0
  %174 = vmatprep.subr.mxu0 0.0
  %175 = vmatpush1.msra.mxu0 0.0
  %176 = vmatprep.subr.mxu0 0.0
  %177 = vmatpush1.msra.mxu0 0.0
  %178 = vmatprep.subr.mxu0 0.0
  %179 = vmatpush1.msra.mxu0 0.0
  %180 = vmatprep.subr.mxu0 0.0
  %181 = vmatpush1.msra.mxu0 0.0
  %182 = vmatprep.subr.mxu0 0.0
  %183 = vmatpush1.msra.mxu0 0.0
  %184 = vmatprep.subr.mxu0 0.0
  %185 = vmatpush1.msra.mxu0 0.0
  %186 = vmatprep.subr.mxu0 0.0
  %187 = vmatpush1.msra.mxu0 0.0
  %188 = vmatprep.subr.mxu0 0.0
  %189 = vmatpush1.msra.mxu0 0.0
  %190 = vmatprep.subr.mxu0 0.0
  %191 = vmatpush1.msra.mxu0 0.0
  %192 = vmatprep.subr.mxu0 0.0
  %193 = vmatpush1.msra.mxu0 0.0
  %194 = vmatprep.subr.mxu0 0.0
  %195 = vmatpush1.msra.mxu0 0.0
  %196 = vmatprep.subr.mxu0 0.0
  %197 = vmatpush1.msra.mxu0 0.0
  %198 = vmatprep.mubr.f32.mxu0 0.0
  %199 = vmatmul.mubr.f32.gmra.mrb[0].mxu0 %v132
  %v200 = vpop.f32.mrb[0].mxu0
  %v201 = vadd.f32 %v129, %v200
  %v202 = vpop.f32.mrb[0].mxu0
  %203 = vdwg.mxu0
  %v204 = vld [vmem:[%s3] sm:$0xff]
  %v205 = vld [vmem:[%s3 + $0x8] sm:$0xff]
  %v206 = vld [vmem:[%s3 + $0x10] sm:$0xff]
  %v207 = vld [vmem:[%s3 + $0x18] sm:$0xff]
  %v208 = vld [vmem:[%s3 + $0x20] sm:$0xff]
  %v209 = vld [vmem:[%s3 + $0x28] sm:$0xff]
  %v210 = vld [vmem:[%s3 + $0x30] sm:$0xff]
  %v211 = vld [vmem:[%s3 + $0x38] sm:$0xff]
  %v212 = vld [vmem:[%s3 + $0x40] sm:$0xff]
  %v213 = vld [vmem:[%s3 + $0x48] sm:$0xff]
  %v214 = vld [vmem:[%s3 + $0x50] sm:$0xff]
  %v215 = vld [vmem:[%s3 + $0x58] sm:$0xff]
  %v216 = vld [vmem:[%s4 + $0x2] sm:$0x1]
  %v217 = vlaneseq
  %v218 = vshrl.u32 %v217, 7
  %v219 = vsub.s32 0, %v218
  %v220 = vrot.slane %v216, %v219
  %v222 = vsel %vm130, %v201, 0
  %224 = vmatprep.subr.mxu0 0.0
  %225 = vmatpush1.msra.mxu0 %v204
  %226 = vmatprep.subr.mxu0 0.0
  %227 = vmatpush1.msra.mxu0 %v205
  %228 = vmatprep.subr.mxu0 0.0
  %229 = vmatpush1.msra.mxu0 %v206
  %230 = vmatprep.subr.mxu0 0.0
  %231 = vmatpush1.msra.mxu0 %v207
  %232 = vmatprep.subr.mxu0 0.0
  %233 = vmatpush1.msra.mxu0 %v208
  %234 = vmatprep.subr.mxu0 0.0
  %235 = vmatpush1.msra.mxu0 %v209
  %236 = vmatprep.subr.mxu0 0.0
  %237 = vmatpush1.msra.mxu0 %v210
  %238 = vmatprep.subr.mxu0 0.0
  %239 = vmatpush1.msra.mxu0 %v211
  %240 = vmatprep.subr.mxu0 0.0
  %241 = vmatpush1.msra.mxu0 %v212
  %242 = vmatprep.subr.mxu0 0.0
  %243 = vmatpush1.msra.mxu0 %v213
  %244 = vmatprep.subr.mxu0 0.0
  %245 = vmatpush1.msra.mxu0 %v214
  %246 = vmatprep.subr.mxu0 0.0
  %247 = vmatpush1.msra.mxu0 %v215
  %248 = vmatprep.subr.mxu0 0.0
  %249 = vmatpush1.msra.mxu0 0.0
  %250 = vmatprep.subr.mxu0 0.0
  %251 = vmatpush1.msra.mxu0 0.0
  %252 = vmatprep.subr.mxu0 0.0
  %253 = vmatpush1.msra.mxu0 0.0
  %254 = vmatprep.subr.mxu0 0.0
  %255 = vmatpush1.msra.mxu0 0.0
  %256 = vmatprep.subr.mxu0 0.0
  %257 = vmatpush1.msra.mxu0 0.0
  %258 = vmatprep.subr.mxu0 0.0
  %259 = vmatpush1.msra.mxu0 0.0
  %260 = vmatprep.subr.mxu0 0.0
  %261 = vmatpush1.msra.mxu0 0.0
  %262 = vmatprep.subr.mxu0 0.0
  %263 = vmatpush1.msra.mxu0 0.0
  %264 = vmatprep.subr.mxu0 0.0
  %265 = vmatpush1.msra.mxu0 0.0
  %266 = vmatprep.subr.mxu0 0.0
  %267 = vmatpush1.msra.mxu0 0.0
  %268 = vmatprep.subr.mxu0 0.0
  %269 = vmatpush1.msra.mxu0 0.0
  %270 = vmatprep.subr.mxu0 0.0
  %271 = vmatpush1.msra.mxu0 0.0
  %272 = vmatprep.subr.mxu0 0.0
  %273 = vmatpush1.msra.mxu0 0.0
  %274 = vmatprep.subr.mxu0 0.0
  %275 = vmatpush1.msra.mxu0 0.0
  %276 = vmatprep.subr.mxu0 0.0
  %277 = vmatpush1.msra.mxu0 0.0
  %278 = vmatprep.subr.mxu0 0.0
  %279 = vmatpush1.msra.mxu0 0.0
  %280 = vmatprep.subr.mxu0 0.0
  %281 = vmatpush1.msra.mxu0 0.0
  %282 = vmatprep.subr.mxu0 0.0
  %283 = vmatpush1.msra.mxu0 0.0
  %284 = vmatprep.subr.mxu0 0.0
  %285 = vmatpush1.msra.mxu0 0.0
  %286 = vmatprep.subr.mxu0 0.0
  %287 = vmatpush1.msra.mxu0 0.0
  %288 = vmatprep.mubr.f32.mxu0 0.0
  %289 = vmatmul.mubr.f32.gmra.mrb[0].mxu0 %v222
  %v290 = vpop.f32.mrb[0].mxu0
  %v291 = vadd.f32 %v220, %v290
  %v292 = vpop.f32.mrb[0].mxu0
  %293 = vdwg.mxu0
  %v294 = vmul.f32 %v291, %v291
  %vm295 = vcmask 130048
  %v296 = vsel %vm295, %v294, 0.0
  %297 = vadd.xlane.f32.xlu0 %v296
  %v298 = vpop.xlane.xlu0 %297
  %300 = vrot.lane.b32.xlu0 %v291, 112
  %v301 = vpop.permute.xlu0 %300
  %v303 = vmul.f32 %v291, %v301
  %v304 = vsel %vm295, %v303, 0.0
  %305 = vadd.xlane.f32.xlu0 %v304
  %v306 = vpop.xlane.xlu0 %305
  %308 = vrot.lane.b32.xlu0 %v294, 112
  %v309 = vpop.permute.xlu0 %308
  %v311 = vsel %vm295, %v309, 0.0
  %312 = vadd.xlane.f32.xlu0 %v311
  %v313 = vpop.xlane.xlu0 %312
  %v314 = vmul.f32 %v298, %v313
  %v315 = vmax.f32 %v314, 1e-16
  %v316 = vrsqrt.pop %v315
  %v317 = vmul.f32 %v306, %v316
  %318 = vrot.lane.b32.xlu0 %v291, 96
  %v319 = vpop.permute.xlu0 %318
  %v321 = vmul.f32 %v291, %v319
  %v322 = vsel %vm295, %v321, 0.0
  %323 = vadd.xlane.f32.xlu0 %v322
  %v324 = vpop.xlane.xlu0 %323
  %325 = vrot.lane.b32.xlu0 %v294, 96
  %v326 = vpop.permute.xlu0 %325
  %v328 = vsel %vm295, %v326, 0.0
  %329 = vadd.xlane.f32.xlu0 %v328
  %v330 = vpop.xlane.xlu0 %329
  %v331 = vmul.f32 %v298, %v330
  %v332 = vmax.f32 %v331, 1e-16
  %v333 = vrsqrt.pop %v332
  %v334 = vmul.f32 %v324, %v333
  %vm335 = vcmask 7168
  %v336 = vsel %vm335, %v317, %v334
  %vm337 = vcmask 15360
  %338 = vst.msk [vmem:[%s5] sm:$0xff] %vm337, %v336
  // Predicated region
  $region22: #{mvdnn_forward.1} parent=0 // pred_check
    _
  $region23: #{mvdnn_forward.1} parent=0 // pred_check_branch
    %340 = sbr.rel (0) target = $region25
  $region24: #{mvdnn_forward.1} parent=0 // pred_region
    _
  $region25: #{mvdnn_forward.1} parent=0 // pred_fallthru
    _
  // Predicated region
  $region26: #{mvdnn_forward.1} parent=0 // pred_check
    _
  $region27: #{mvdnn_forward.1} parent=0 // pred_check_branch
    %342 = sbr.rel (0) target = $region29
  $region28: #{mvdnn_forward.1} parent=0 // pred_region
    _
  $region29: #{mvdnn_forward.1} parent=0 // pred_fallthru
    _

</llo_original>
